<compile_context>
chip_gen: v6e
topology: v6e:2x2x1
jax: 0.10.0
libtpu: 0.0.40
codegen_flags: <defaults>
</compile_context>

<pallas_src>
import math
import functools

import jax
import jax.numpy as jnp
import numpy as np
from jax import lax
from jax.experimental import pallas as pl
from jax.experimental.pallas import tpu as pltpu


class Cfg:
    MAX_FREQ = 10.0
    DIMENSIONALITY = 3
    FEAT_SIZE = 32
    BASE = 2.0
    NORM_COORS = False


# ---------------------------------------------------------------------------
# sin(pi * d) for d in [-0.5, 0.5]:
# degree-9 odd minimax polynomial (SLEEF sinf_u35 coefficients, rescaled so the
# argument is already divided by pi).  |abs err| < ~4e-7 on the full range.
# ---------------------------------------------------------------------------
_SLEEF_SIN = np.array([1.0,
                       -0.166666597127914428710938,
                       0.00833307858556509017944336,
                       -0.0001981069071916863322258,
                       2.6083159809786593541503e-06], dtype=np.float64)
_C1, _C3, _C5, _C7, _C9 = (float(c * np.pi ** (2 * i + 1))
                           for i, c in enumerate(_SLEEF_SIN))


# ---------------------------------------------------------------------------
# Host-side constant tables
# ---------------------------------------------------------------------------
def _make_tables(cfg, g):
    """Build the MXU coefficient matrix and phase row.

    bmat : (D*g, g*FEAT) f32.  Column c = q*FEAT + f (point-slot q, channel f),
           row j = q*D + d -> coefficient scale_k / div_d (argument in pi units).
    ph   : (1, g*FEAT)    f32.  0.5 (i.e. +pi/2) for cos channels, else 0.
    Channels [0, pad) stay all-zero -> sin(0) = 0 == the module's left zero pad.
    """
    D = cfg.DIMENSIONALITY
    feat = cfg.FEAT_SIZE
    nb = math.floor(feat / D / 2)
    pad = feat - nb * 2 * D
    # torch.logspace(0, log(max_freq/2)/log(base), nb, base=base)
    exps = np.linspace(0.0, math.log(cfg.MAX_FREQ / 2) / math.log(cfg.BASE), nb)
    scales = np.asarray(cfg.BASE, dtype=np.float64) ** exps
    if cfg.NORM_COORS:
        div = np.ones(D, dtype=np.float64)
    else:
        assert D == 3, "hard-coded /48,/48,/4 divisors assume 3-D coordinates"
        div = np.array([48.0, 48.0, 4.0], dtype=np.float64)

    coef = np.zeros((feat, D), dtype=np.float64)   # per-channel coeff (pi units)
    phase = np.zeros((feat,), dtype=np.float64)    # per-channel phase (pi units)
    for d in range(D):
        for k in range(nb):
            c_sin = pad + d * 2 * nb + k
            c_cos = c_sin + nb
            coef[c_sin, d] = scales[k] / div[d]
            coef[c_cos, d] = scales[k] / div[d]
            phase[c_cos] = 0.5                     # cos(t) = sin(t + pi/2)

    lanes = g * feat                               # = 128
    bmat = np.zeros((D * g, lanes), dtype=np.float64)
    ph = np.zeros((1, lanes), dtype=np.float64)
    for q in range(g):
        for f in range(feat):
            c = q * feat + f
            ph[0, c] = phase[f]
            for d in range(D):
                bmat[q * D + d, c] = coef[f, d]
    return jnp.asarray(bmat.astype(np.float32)), jnp.asarray(ph.astype(np.float32))


# ---------------------------------------------------------------------------
# Pallas kernel
# ---------------------------------------------------------------------------
def _pos_enc_kernel(bmat_ref, ph_ref, x_ref, o_ref, *, chunk_rows, n_chunks):
    # bmat_ref: (D*g, 128) f32   coefficient matrix (argument in pi units)
    # ph_ref  : (1,   128) f32   per-lane phase (pi units)
    # x_ref   : (R,  D*g)  f32   g points per row, natural row-major order
    # o_ref   : (R,  128)  f32   g points * FEAT channels per row (lane-dense)
    rhs = bmat_ref[...]                              # (D*g, 128), 2 vregs
    ph = ph_ref[...]                                 # (1, 128)

    def body(c, carry):
        # Sub-chunk loop keeps every intermediate at <= 16 vregs so the
        # elementwise sine chain stays in registers (no spill-driven vst load).
        r0 = pl.multiple_of(c * chunk_rows, chunk_rows)
        lhs = x_ref[pl.ds(r0, chunk_rows), :]        # (chunk, D*g)

        # arg / pi, computed on the (otherwise idle) MXU.
        u = lax.dot_general(lhs, rhs, (((1,), (0,)), ((), ())),
                            preferred_element_type=jnp.float32,
                            precision=lax.Precision.HIGHEST)
        u = u + ph                                   # (chunk, 128)

        # sin(pi * u):  u = k + d, d in [-0.5, 0.5];  sin(pi u) = (-1)^k sin(pi d)
        k = jnp.floor(u + 0.5)
        d = u - k
        ki = k.astype(jnp.int32)
        d = jnp.where((ki & 1) == 0, d, -d)          # fold sign into d (sin is odd)
        d2 = d * d
        p = _C9 * d2 + _C7
        p = p * d2 + _C5
        p = p * d2 + _C3
        p = p * d2 + _C1
        o_ref[pl.ds(r0, chunk_rows), :] = (d * p).astype(o_ref.dtype)
        return carry

    lax.fori_loop(0, n_chunks, body, 0)


# ---------------------------------------------------------------------------
# Wrapper
# ---------------------------------------------------------------------------
def positional_encoder(x, cfg=Cfg, *, tile_points=16384, out_dtype=jnp.float32):
    """x: [B, N, 3] -> [B, N, FEAT_SIZE] (matches the PyTorch module)."""
    B, N, D = x.shape
    assert D == cfg.DIMENSIONALITY
    feat = cfg.FEAT_SIZE
    assert 128 % feat == 0, "lane packing assumes FEAT_SIZE divides 128"
    g = 128 // feat                      # points packed per 128-lane output row
    Dk = D * g                           # LHS width (12 for D=3, FEAT=32)
    P = B * N

    def _round_up(a, m):
        return -(-a // m) * m

    if P <= tile_points:
        Pp = _round_up(max(P, 8 * g), 8 * g)      # rows multiple of 8
        tp = Pp
        nsteps = 1
    else:
        tp = _round_up(tile_points, 128 * g)      # block rows multiple of 128
        nsteps = -(-P // tp)
        if nsteps % 2 == 1:                       # prefer even steps (v7x: 2 TCs)
            tp = _round_up(-(-P // (nsteps + 1)), 128 * g)
            nsteps = -(-P // tp)
        Pp = nsteps * tp

    rows_total = Pp // g
    block_rows = tp // g
    chunk = math.gcd(block_rows, 128)
    n_chunks = block_rows // chunk

    bmat, ph = _make_tables(cfg, g)               # (Dk,128), (1,128)

    # Input prep is a flat reshape only (no transpose): row r of xlhs holds the
    # g consecutive points g*r .. g*r+g-1 in their natural coordinate order.
    xf = x.reshape(P, D).astype(jnp.float32)
    if Pp != P:
        xf = jnp.pad(xf, ((0, Pp - P), (0, 0)))   # ragged tail (sliced off below)
    xlhs = xf.reshape(rows_total, Dk)

    kernel = functools.partial(_pos_enc_kernel, chunk_rows=chunk, n_chunks=n_chunks)
    out = pl.pallas_call(
        kernel,
        out_shape=jax.ShapeDtypeStruct((rows_total, 128), out_dtype),
        grid=(nsteps,),
        in_specs=[
            pl.BlockSpec((Dk, 128), lambda i: (0, 0)),          # coefficient table
            pl.BlockSpec((1, 128), lambda i: (0, 0)),           # phase row
            pl.BlockSpec((block_rows, Dk), lambda i: (i, 0)),   # packed points
        ],
        out_specs=pl.BlockSpec((block_rows, 128), lambda i: (i, 0)),
        compiler_params=pltpu.CompilerParams(
            dimension_semantics=("parallel",)),
    )(bmat, ph, xlhs)

    # Flat layout of (rows, 128) is already row-major [Pp, FEAT]: reshape only,
    # no transpose.  Keep the [:P] slice so padded tail points are dropped.
    enc = out.reshape(Pp, feat)
    if Pp != P:
        enc = enc[:P]
    return enc.reshape(B, N, feat)


# ---------------------------------------------------------------------------
# Pure-JAX reference mirroring the PyTorch forward exactly
# ---------------------------------------------------------------------------
def positional_encoder_ref(x, cfg=Cfg):
    num_bands = math.floor(cfg.FEAT_SIZE / cfg.DIMENSIONALITY / 2)
    exps = np.linspace(0.0, math.log(cfg.MAX_FREQ / 2) / math.log(cfg.BASE),
                       num_bands)
    scales = jnp.asarray((np.asarray(cfg.BASE) ** exps).astype(np.float32))
    pad = cfg.FEAT_SIZE - num_bands * 2 * cfg.DIMENSIONALITY
    x = x.astype(jnp.float32)
    if not cfg.NORM_COORS:
        x = x.at[:, :, 0].set(x[:, :, 0] / 48)
        x = x.at[:, :, 1].set(x[:, :, 1] / 48)
        x = x.at[:, :, 2].set(x[:, :, 2] / 4)
    xe = x[..., None] * scales[None, None, None, :] * math.pi   # [B,N,3,nb]
    xe = jnp.concatenate([jnp.sin(xe), jnp.cos(xe)], axis=-1)   # [B,N,3,2nb]
    xe = xe.reshape(xe.shape[0], xe.shape[1], -1)               # [B,N,3*2nb]
    return jnp.pad(xe, ((0, 0), (0, 0), (pad, 0)))              # [B,N,FEAT]


if __name__ == "__main__":
    key = jax.random.PRNGKey(0)

    # Small shape consistent with the module: [B, N, 3] point coordinates.
    B, N = 2, 16
    x = jax.random.uniform(key, (B, N, 3), dtype=jnp.float32,
                           minval=-10.0, maxval=10.0)
    out = jax.block_until_ready(positional_encoder(x))
    ref = positional_encoder_ref(x)
    # Tolerance: phase arguments reach ~13*pi, so MXU (HIGHEST) + f32 rounding of
    # the argument bounds the error well below 5e-5.
    np.testing.assert_allclose(np.asarray(out), np.asarray(ref),
                               rtol=5e-5, atol=5e-5)

    # Exercise the tiled path: multi-step grid + ragged-tail padding.
    key2 = jax.random.PRNGKey(1)
    x2 = jax.random.uniform(key2, (2, 600, 3), dtype=jnp.float32,
                            minval=-10.0, maxval=10.0)
    out2 = jax.block_until_ready(positional_encoder(x2, tile_points=512))
    ref2 = positional_encoder_ref(x2)
    np.testing.assert_allclose(np.asarray(out2), np.asarray(ref2),
                               rtol=5e-5, atol=5e-5)

    print("KERNEL_OK")
</pallas_src>

<mosaic_0001>
module attributes {stable_mosaic.version = 11 : i64} {
  func.func @_pos_enc_kernel(%arg0: i32, %arg1: memref<12x128xf32, #tpu.memory_space<vmem>>, %arg2: memref<1x128xf32, #tpu.memory_space<vmem>>, %arg3: memref<8x12xf32, #tpu.memory_space<vmem>>, %arg4: memref<8x128xf32, #tpu.memory_space<vmem>>) attributes {dimension_semantics = [#tpu.dimension_semantics<parallel>], iteration_bounds = array<i64: 1>, scalar_prefetch = 0 : i64, scratch_operands = 0 : i64, tpu.core_type = #tpu.core_type<tc>, window_params = [{pipeline_mode = #tpu.pipeline_mode<synchronous>, transform_indices = @transform_0, window_bounds = array<i64: 12, 128>}, {pipeline_mode = #tpu.pipeline_mode<synchronous>, transform_indices = @transform_1, window_bounds = array<i64: 1, 128>}, {transform_indices = @transform_2, window_bounds = array<i64: 8, 12>}, {transform_indices = @transform_3, window_bounds = array<i64: 8, 128>}]} {
    %c0 = arith.constant 0 : index
    %c0_0 = arith.constant 0 : index
    %0 = vector.load %arg1[%c0, %c0_0] : memref<12x128xf32, #tpu.memory_space<vmem>>, vector<12x128xf32>
    %c0_1 = arith.constant 0 : index
    %c0_2 = arith.constant 0 : index
    %1 = vector.load %arg2[%c0_1, %c0_2] : memref<1x128xf32, #tpu.memory_space<vmem>>, vector<1x128xf32>
    %c0_i32 = arith.constant 0 : i32
    %c8_i32 = arith.constant 8 : i32
    %2 = arith.muli %c0_i32, %c8_i32 : i32
    %3 = tpu.assume_multiple %2, 8 : i32
    %4 = arith.index_cast %3 : i32 to index
    %c0_3 = arith.constant 0 : index
    %5 = vector.load %arg3[%4, %c0_3] : memref<8x12xf32, #tpu.memory_space<vmem>>, vector<8x12xf32>
    %cst = arith.constant dense<0.000000e+00> : vector<8x128xf32>
    %6 = tpu.matmul %5, %0, %cst {dimension_numbers = #tpu.dot_dimension_numbers<[1], [0], [0], [1], [0, 0, 1, 1], [], []>, precision = #tpu.contract_precision<fp32>} : vector<8x12xf32>, vector<12x128xf32>, vector<8x128xf32> -> vector<8x128xf32>
    %7 = vector.broadcast %1 : vector<1x128xf32> to vector<8x128xf32>
    %8 = arith.addf %6, %7 : vector<8x128xf32>
    %cst_4 = arith.constant 5.000000e-01 : f32
    %9 = vector.broadcast %cst_4 : f32 to vector<8x128xf32>
    %10 = arith.addf %8, %9 : vector<8x128xf32>
    %11 = math.floor %10 : vector<8x128xf32>
    %12 = arith.subf %8, %11 : vector<8x128xf32>
    %13 = arith.fptosi %11 : vector<8x128xf32> to vector<8x128xi32>
    %c1_i32 = arith.constant 1 : i32
    %14 = vector.broadcast %c1_i32 : i32 to vector<8x128xi32>
    %15 = arith.andi %13, %14 : vector<8x128xi32>
    %c0_i32_5 = arith.constant 0 : i32
    %16 = vector.broadcast %c0_i32_5 : i32 to vector<8x128xi32>
    %17 = arith.cmpi eq, %15, %16 : vector<8x128xi32>
    %cst_6 = arith.constant 0.000000e+00 : f32
    %18 = vector.broadcast %cst_6 : f32 to vector<8x128xf32>
    %19 = arith.subf %18, %12 : vector<8x128xf32>
    %20 = arith.select %17, %12, %19 : vector<8x128xi1>, vector<8x128xf32>
    %21 = arith.mulf %20, %20 : vector<8x128xf32>
    %cst_7 = arith.constant 0.077751547 : f32
    %22 = vector.broadcast %cst_7 : f32 to vector<8x128xf32>
    %23 = arith.mulf %22, %21 : vector<8x128xf32>
    %cst_8 = arith.constant -0.598340929 : f32
    %24 = vector.broadcast %cst_8 : f32 to vector<8x128xf32>
    %25 = arith.addf %23, %24 : vector<8x128xf32>
    %26 = arith.mulf %25, %21 : vector<8x128xf32>
    %cst_9 = arith.constant 2.55008602 : f32
    %27 = vector.broadcast %cst_9 : f32 to vector<8x128xf32>
    %28 = arith.addf %26, %27 : vector<8x128xf32>
    %29 = arith.mulf %28, %21 : vector<8x128xf32>
    %cst_10 = arith.constant -5.16771078 : f32
    %30 = vector.broadcast %cst_10 : f32 to vector<8x128xf32>
    %31 = arith.addf %29, %30 : vector<8x128xf32>
    %32 = arith.mulf %31, %21 : vector<8x128xf32>
    %cst_11 = arith.constant 3.14159274 : f32
    %33 = vector.broadcast %cst_11 : f32 to vector<8x128xf32>
    %34 = arith.addf %32, %33 : vector<8x128xf32>
    %35 = arith.mulf %20, %34 : vector<8x128xf32>
    %36 = arith.index_cast %3 : i32 to index
    %c0_12 = arith.constant 0 : index
    %37 = vector.load %arg4[%36, %c0_12] : memref<8x128xf32, #tpu.memory_space<vmem>>, vector<8x128xf32>
    tpu.vector_store %arg4[%36, %c0_12], %35 {strides = array<i32>} : memref<8x128xf32, #tpu.memory_space<vmem>>, vector<8x128xf32>,
    %c1_i32_13 = arith.constant 1 : i32
    return
  }
  func.func @transform_0(%arg0: i32) -> (i32, i32) {
    %c0_i32 = arith.constant 0 : i32
    %c0_i32_0 = arith.constant 0 : i32
    %c0_i32_1 = arith.constant 0 : i32
    return %c0_i32, %c0_i32_0 : i32, i32
  }
  func.func @transform_1(%arg0: i32) -> (i32, i32) {
    %c0_i32 = arith.constant 0 : i32
    %c0_i32_0 = arith.constant 0 : i32
    %c0_i32_1 = arith.constant 0 : i32
    return %c0_i32, %c0_i32_0 : i32, i32
  }
  func.func @transform_2(%arg0: i32) -> (i32, i32) {
    %c0_i32 = arith.constant 0 : i32
    %c0_i32_0 = arith.constant 0 : i32
    return %arg0, %c0_i32 : i32, i32
  }
  func.func @transform_3(%arg0: i32) -> (i32, i32) {
    %c0_i32 = arith.constant 0 : i32
    %c0_i32_0 = arith.constant 0 : i32
    return %arg0, %c0_i32 : i32, i32
  }
}

</mosaic_0001>

<llo_original>
// kernel: tpu_custom_call.1
$region0: #{tpu_custom_call.1}
  #allocation0 [shape = 'u32[]', space=smem, size = 0x4, offset = 0x4, fixed_abs, tag = 'smem constant byte address 0x4 - core index']
  #allocation1 [shape = 'u32[144,128]{1,0:T(1,128)}', space=vmem, size = 0x12000, scoped, tag = 'internal scratch']
  %s0 = inlined_call_operand.hbm [shape: f32[12,128], index: 0, kind: input, shape index: {}]
  %s1 = inlined_call_operand.vmem [shape: f32[1,128], index: 1, kind: input, shape index: {}]
  %s2 = inlined_call_operand.hbm [shape: f32[8,12], index: 2, kind: input, shape index: {}]
  %s3 = inlined_call_operand.hbm [shape: f32[8,128], index: 3, kind: output, shape index: {}]
  %s4 = sld [smem:[#allocation0]]
  $region30: #{tpu_custom_call.1} parent=0
    _
  %s6 = ssub.s32 1, %s4
  %s7 = scalar_select 0, %s6, %s4
  $region1: #{tpu_custom_call.1} parent=0
    #allocation2 [shape = 'u8[8192]{0}', space=vmem, size = 0x2000, scoped, tag = 'input window, operand 0, single buffered']
    #allocation3 [shape = 's32[1]{0}', space=sflag, size = 0x4, scoped, tag = 'scoped memory for tpu_custom_call.1']
    #allocation4 [shape = 's32[1]{0}', space=sflag, size = 0x4, scoped, tag = 'scoped memory for tpu_custom_call.1']
    #allocation5 [shape = 'u8[4096]{0}', space=vmem, size = 0x1000, scoped, tag = 'input window, operand 2, single buffered']
    #allocation6 [shape = 's32[1]{0}', space=sflag, size = 0x4, scoped, tag = 'scoped memory for tpu_custom_call.1']
    #allocation7 [shape = 'u8[4096]{0}', space=vmem, size = 0x1000, scoped, tag = 'output window, operand 0, single buffered']
    %8 = vsyncpa [#allocation3], 0
    %9 = vsyncpa [#allocation6], 0
    %10 = vsyncpa [#allocation4], 0
    // Predicated region
    $region2: #{tpu_custom_call.1} parent=1 // pred_check
      _
    $region3: #{tpu_custom_call.1} parent=1 // pred_check_branch
      %12 = sbr.rel (0) target = $region5
    $region4: #{tpu_custom_call.1} parent=1 // pred_region
      %s14 = ssub.s32 256, 256
      %15 = vsyncadd [#allocation3], %s14
      %s16 = sshll.u32 [#allocation2], 4
      %s17 = int_to_ptr.vmem [resolvable:$true] %s16
      %22 = dma.hbm_to_vmem [thread:$0]  %s0, 256, %s17, [#allocation3], 128, 128, 8
    $region5: #{tpu_custom_call.1} parent=1 // pred_fallthru
      _
    // Predicated region
    $region6: #{tpu_custom_call.1} parent=1 // pred_check
      _
    $region7: #{tpu_custom_call.1} parent=1 // pred_check_branch
      %24 = sbr.rel (0) target = $region9
    $region8: #{tpu_custom_call.1} parent=1 // pred_region
      _
    $region9: #{tpu_custom_call.1} parent=1 // pred_fallthru
      _
    // Predicated region
    $region10: #{tpu_custom_call.1} parent=1 // pred_check
      _
    $region11: #{tpu_custom_call.1} parent=1 // pred_check_branch
      %26 = sbr.rel (0) target = $region13
    $region12: #{tpu_custom_call.1} parent=1 // pred_region
      %s28 = ssub.s32 128, 128
      %29 = vsyncadd [#allocation6], %s28
      %s31 = sshll.u32 [#allocation5], 4
      %s32 = int_to_ptr.vmem [resolvable:$true] %s31
      %34 = dma.hbm_to_vmem [thread:$0]  %s2, 128, %s32, [#allocation6]
    $region13: #{tpu_custom_call.1} parent=1 // pred_fallthru
      _
    // Predicated region
    $region14: #{tpu_custom_call.1} parent=1 // pred_check
      _
    $region15: #{tpu_custom_call.1} parent=1 // pred_check_branch
      %36 = sbr.rel (0) target = $region17
    $region16: #{tpu_custom_call.1} parent=1 // pred_region
      %37 = dma.done [#allocation3], 256
    $region17: #{tpu_custom_call.1} parent=1 // pred_fallthru
      _
    // Predicated region
    $region18: #{tpu_custom_call.1} parent=1 // pred_check
      _
    $region19: #{tpu_custom_call.1} parent=1 // pred_check_branch
      %39 = sbr.rel (0) target = $region21
    $region20: #{tpu_custom_call.1} parent=1 // pred_region
      %40 = dma.done [#allocation6], 128
    $region21: #{tpu_custom_call.1} parent=1 // pred_fallthru
      _
    %v41 = vld [vmem:[#allocation2] sm:$0xff]
    %v42 = vld [vmem:[#allocation2 + $0x8] sm:$0xf]
    %v43 = vld [vmem:[%s1] sm:$0x1]
    %v44 = vld [vmem:[#allocation5] sm:$0xff]
    %v46 = vlaneseq
    %v47 = vshrl.u32 %v46, 7
    %v48 = vsub.s32 0, %v47
    %v49 = vrot.slane %v43, %v48
    %vm51 = vcmask 97280
    %v53 = vsel %vm51, %v44, 0
    %vm55 = vcmask 1043456
    %v57 = vsel %vm55, %v42, 0
    %59 = vmatprep.subr.mxu0 0.0
    %60 = vmatpush1.msra.mxu0 0.0
    %61 = vmatprep.subr.mxu0 0.0
    %62 = vmatpush1.msra.mxu0 0.0
    %63 = vmatprep.subr.mxu0 0.0
    %64 = vmatpush1.msra.mxu0 0.0
    %65 = vmatprep.subr.mxu0 0.0
    %66 = vmatpush1.msra.mxu0 0.0
    %67 = vmatprep.subr.mxu0 0.0
    %68 = vmatpush1.msra.mxu0 0.0
    %69 = vmatprep.subr.mxu0 0.0
    %70 = vmatpush1.msra.mxu0 0.0
    %71 = vmatprep.subr.mxu0 0.0
    %72 = vmatpush1.msra.mxu0 0.0
    %73 = vmatprep.subr.mxu0 0.0
    %74 = vmatpush1.msra.mxu0 0.0
    %75 = vmatprep.subr.mxu0 0.0
    %76 = vmatpush1.msra.mxu0 0.0
    %77 = vmatprep.subr.mxu0 0.0
    %78 = vmatpush1.msra.mxu0 0.0
    %79 = vmatprep.subr.mxu0 0.0
    %80 = vmatpush1.msra.mxu0 0.0
    %81 = vmatprep.subr.mxu0 0.0
    %82 = vmatpush1.msra.mxu0 0.0
    %83 = vmatprep.subr.mxu0 0.0
    %84 = vmatpush1.msra.mxu0 0.0
    %85 = vmatprep.subr.mxu0 0.0
    %86 = vmatpush1.msra.mxu0 0.0
    %87 = vmatprep.subr.mxu0 0.0
    %v88 = vand.u32 %v57, 4294901760
    %89 = vmatpush1.msra.mxu0 %v88
    %90 = vmatprep.subr.mxu0 0.0
    %v91 = vand.u32 %v41, 4294901760
    %92 = vmatpush1.msra.mxu0 %v91
    %93 = vmatprep.subr.mxu0 0.0
    %94 = vmatpush2.msra.mxu0 0.0
    %95 = vmatprep.subr.mxu0 0.0
    %96 = vmatpush2.msra.mxu0 0.0
    %97 = vmatprep.subr.mxu0 0.0
    %98 = vmatpush2.msra.mxu0 0.0
    %99 = vmatprep.subr.mxu0 0.0
    %100 = vmatpush2.msra.mxu0 0.0
    %101 = vmatprep.subr.mxu0 0.0
    %102 = vmatpush2.msra.mxu0 0.0
    %103 = vmatprep.subr.mxu0 0.0
    %104 = vmatpush2.msra.mxu0 0.0
    %105 = vmatprep.subr.mxu0 0.0
    %106 = vmatpush2.msra.mxu0 0.0
    %107 = vmatprep.subr.mxu0 0.0
    %108 = vmatpush2.msra.mxu0 0.0
    %109 = vmatprep.subr.mxu0 0.0
    %110 = vmatpush2.msra.mxu0 0.0
    %111 = vmatprep.subr.mxu0 0.0
    %112 = vmatpush2.msra.mxu0 0.0
    %113 = vmatprep.subr.mxu0 0.0
    %114 = vmatpush2.msra.mxu0 0.0
    %115 = vmatprep.subr.mxu0 0.0
    %116 = vmatpush2.msra.mxu0 0.0
    %117 = vmatprep.subr.mxu0 0.0
    %118 = vmatpush2.msra.mxu0 0.0
    %119 = vmatprep.subr.mxu0 0.0
    %120 = vmatpush2.msra.mxu0 0.0
    %121 = vmatprep.subr.mxu0 0.0
    %122 = vmatpush2.msra.mxu0 0.0
    %123 = vmatprep.subr.mxu0 0.0
    %124 = vmatpush2.msra.mxu0 0.0
    %125 = vmatprep.mubr.f32.mxu0 0.0
    %v126 = vand.u32 %v53, 4294901760
    %v127 = vsub.f32 %v53, %v126
    %v128 = vand.u32 %v127, 4294901760
    %v129 = vsub.f32 %v127, %v128
    %v130 = vand.u32 %v129, 4294901760
    %131 = vmatmul.mubr.f32.gmra.mxu0 %v130
    %v132 = vpop.f32.mrf.mxu0
    %v133 = vadd.f32 %v49, %v132
    %v134 = vpop.f32.mrf.mxu0
    %135 = vdwg.mxu0
    %136 = vmatprep.subr.mxu0 0.0
    %137 = vmatpush1.msra.mxu0 0.0
    %138 = vmatprep.subr.mxu0 0.0
    %139 = vmatpush1.msra.mxu0 0.0
    %140 = vmatprep.subr.mxu0 0.0
    %141 = vmatpush1.msra.mxu0 0.0
    %142 = vmatprep.subr.mxu0 0.0
    %143 = vmatpush1.msra.mxu0 0.0
    %144 = vmatprep.subr.mxu0 0.0
    %145 = vmatpush1.msra.mxu0 0.0
    %146 = vmatprep.subr.mxu0 0.0
    %147 = vmatpush1.msra.mxu0 0.0
    %148 = vmatprep.subr.mxu0 0.0
    %149 = vmatpush1.msra.mxu0 0.0
    %150 = vmatprep.subr.mxu0 0.0
    %151 = vmatpush1.msra.mxu0 0.0
    %152 = vmatprep.subr.mxu0 0.0
    %153 = vmatpush1.msra.mxu0 0.0
    %154 = vmatprep.subr.mxu0 0.0
    %155 = vmatpush1.msra.mxu0 0.0
    %156 = vmatprep.subr.mxu0 0.0
    %157 = vmatpush1.msra.mxu0 0.0
    %158 = vmatprep.subr.mxu0 0.0
    %159 = vmatpush1.msra.mxu0 0.0
    %160 = vmatprep.subr.mxu0 0.0
    %161 = vmatpush1.msra.mxu0 0.0
    %162 = vmatprep.subr.mxu0 0.0
    %163 = vmatpush1.msra.mxu0 0.0
    %164 = vmatprep.subr.mxu0 0.0
    %v165 = vand.u32 %v57, 4294901760
    %v166 = vsub.f32 %v57, %v165
    %v167 = vand.u32 %v166, 4294901760
    %v168 = vsub.f32 %v166, %v167
    %v169 = vand.u32 %v168, 4294901760
    %170 = vmatpush1.msra.mxu0 %v169
    %171 = vmatprep.subr.mxu0 0.0
    %v172 = vand.u32 %v41, 4294901760
    %v173 = vsub.f32 %v41, %v172
    %v174 = vand.u32 %v173, 4294901760
    %v175 = vsub.f32 %v173, %v174
    %v176 = vand.u32 %v175, 4294901760
    %177 = vmatpush1.msra.mxu0 %v176
    %178 = vmatprep.subr.mxu0 0.0
    %179 = vmatpush2.msra.mxu0 0.0
    %180 = vmatprep.subr.mxu0 0.0
    %181 = vmatpush2.msra.mxu0 0.0
    %182 = vmatprep.subr.mxu0 0.0
    %183 = vmatpush2.msra.mxu0 0.0
    %184 = vmatprep.subr.mxu0 0.0
    %185 = vmatpush2.msra.mxu0 0.0
    %186 = vmatprep.subr.mxu0 0.0
    %187 = vmatpush2.msra.mxu0 0.0
    %188 = vmatprep.subr.mxu0 0.0
    %189 = vmatpush2.msra.mxu0 0.0
    %190 = vmatprep.subr.mxu0 0.0
    %191 = vmatpush2.msra.mxu0 0.0
    %192 = vmatprep.subr.mxu0 0.0
    %193 = vmatpush2.msra.mxu0 0.0
    %194 = vmatprep.subr.mxu0 0.0
    %195 = vmatpush2.msra.mxu0 0.0
    %196 = vmatprep.subr.mxu0 0.0
    %197 = vmatpush2.msra.mxu0 0.0
    %198 = vmatprep.subr.mxu0 0.0
    %199 = vmatpush2.msra.mxu0 0.0
    %200 = vmatprep.subr.mxu0 0.0
    %201 = vmatpush2.msra.mxu0 0.0
    %202 = vmatprep.subr.mxu0 0.0
    %203 = vmatpush2.msra.mxu0 0.0
    %204 = vmatprep.subr.mxu0 0.0
    %205 = vmatpush2.msra.mxu0 0.0
    %206 = vmatprep.subr.mxu0 0.0
    %207 = vmatpush2.msra.mxu0 0.0
    %208 = vmatprep.subr.mxu0 0.0
    %209 = vmatpush2.msra.mxu0 0.0
    %210 = vmatprep.mubr.f32.mxu0 0.0
    %v211 = vand.u32 %v53, 4294901760
    %212 = vmatmul.mubr.f32.gmra.mxu0 %v211
    %v213 = vpop.f32.mrf.mxu0
    %v214 = vadd.f32 %v133, %v213
    %v215 = vpop.f32.mrf.mxu0
    %216 = vdwg.mxu0
    %217 = vmatprep.subr.mxu0 0.0
    %218 = vmatpush1.msra.mxu0 0.0
    %219 = vmatprep.subr.mxu0 0.0
    %220 = vmatpush1.msra.mxu0 0.0
    %221 = vmatprep.subr.mxu0 0.0
    %222 = vmatpush1.msra.mxu0 0.0
    %223 = vmatprep.subr.mxu0 0.0
    %224 = vmatpush1.msra.mxu0 0.0
    %225 = vmatprep.subr.mxu0 0.0
    %226 = vmatpush1.msra.mxu0 0.0
    %227 = vmatprep.subr.mxu0 0.0
    %228 = vmatpush1.msra.mxu0 0.0
    %229 = vmatprep.subr.mxu0 0.0
    %230 = vmatpush1.msra.mxu0 0.0
    %231 = vmatprep.subr.mxu0 0.0
    %232 = vmatpush1.msra.mxu0 0.0
    %233 = vmatprep.subr.mxu0 0.0
    %234 = vmatpush1.msra.mxu0 0.0
    %235 = vmatprep.subr.mxu0 0.0
    %236 = vmatpush1.msra.mxu0 0.0
    %237 = vmatprep.subr.mxu0 0.0
    %238 = vmatpush1.msra.mxu0 0.0
    %239 = vmatprep.subr.mxu0 0.0
    %240 = vmatpush1.msra.mxu0 0.0
    %241 = vmatprep.subr.mxu0 0.0
    %242 = vmatpush1.msra.mxu0 0.0
    %243 = vmatprep.subr.mxu0 0.0
    %244 = vmatpush1.msra.mxu0 0.0
    %245 = vmatprep.subr.mxu0 0.0
    %v246 = vand.u32 %v57, 4294901760
    %v247 = vsub.f32 %v57, %v246
    %248 = vmatpush1.msra.mxu0 %v247
    %249 = vmatprep.subr.mxu0 0.0
    %v250 = vand.u32 %v41, 4294901760
    %v251 = vsub.f32 %v41, %v250
    %252 = vmatpush1.msra.mxu0 %v251
    %253 = vmatprep.subr.mxu0 0.0
    %254 = vmatpush2.msra.mxu0 0.0
    %255 = vmatprep.subr.mxu0 0.0
    %256 = vmatpush2.msra.mxu0 0.0
    %257 = vmatprep.subr.mxu0 0.0
    %258 = vmatpush2.msra.mxu0 0.0
    %259 = vmatprep.subr.mxu0 0.0
    %260 = vmatpush2.msra.mxu0 0.0
    %261 = vmatprep.subr.mxu0 0.0
    %262 = vmatpush2.msra.mxu0 0.0
    %263 = vmatprep.subr.mxu0 0.0
    %264 = vmatpush2.msra.mxu0 0.0
    %265 = vmatprep.subr.mxu0 0.0
    %266 = vmatpush2.msra.mxu0 0.0
    %267 = vmatprep.subr.mxu0 0.0
    %268 = vmatpush2.msra.mxu0 0.0
    %269 = vmatprep.subr.mxu0 0.0
    %270 = vmatpush2.msra.mxu0 0.0
    %271 = vmatprep.subr.mxu0 0.0
    %272 = vmatpush2.msra.mxu0 0.0
    %273 = vmatprep.subr.mxu0 0.0
    %274 = vmatpush2.msra.mxu0 0.0
    %275 = vmatprep.subr.mxu0 0.0
    %276 = vmatpush2.msra.mxu0 0.0
    %277 = vmatprep.subr.mxu0 0.0
    %278 = vmatpush2.msra.mxu0 0.0
    %279 = vmatprep.subr.mxu0 0.0
    %280 = vmatpush2.msra.mxu0 0.0
    %281 = vmatprep.subr.mxu0 0.0
    %282 = vmatpush2.msra.mxu0 0.0
    %283 = vmatprep.subr.mxu0 0.0
    %284 = vmatpush2.msra.mxu0 0.0
    %285 = vmatprep.mubr.f32.mxu0 0.0
    %v286 = vand.u32 %v53, 4294901760
    %v287 = vsub.f32 %v53, %v286
    %288 = vmatmul.mubr.f32.gmra.mxu0 %v287
    %v289 = vpop.f32.mrf.mxu0
    %v290 = vadd.f32 %v214, %v289
    %v291 = vpop.f32.mrf.mxu0
    %292 = vdwg.mxu0
    %293 = vmatprep.subr.mxu0 0.0
    %294 = vmatpush1.msra.mxu0 0.0
    %295 = vmatprep.subr.mxu0 0.0
    %296 = vmatpush1.msra.mxu0 0.0
    %297 = vmatprep.subr.mxu0 0.0
    %298 = vmatpush1.msra.mxu0 0.0
    %299 = vmatprep.subr.mxu0 0.0
    %300 = vmatpush1.msra.mxu0 0.0
    %301 = vmatprep.subr.mxu0 0.0
    %302 = vmatpush1.msra.mxu0 0.0
    %303 = vmatprep.subr.mxu0 0.0
    %304 = vmatpush1.msra.mxu0 0.0
    %305 = vmatprep.subr.mxu0 0.0
    %306 = vmatpush1.msra.mxu0 0.0
    %307 = vmatprep.subr.mxu0 0.0
    %308 = vmatpush1.msra.mxu0 0.0
    %309 = vmatprep.subr.mxu0 0.0
    %310 = vmatpush1.msra.mxu0 0.0
    %311 = vmatprep.subr.mxu0 0.0
    %312 = vmatpush1.msra.mxu0 0.0
    %313 = vmatprep.subr.mxu0 0.0
    %314 = vmatpush1.msra.mxu0 0.0
    %315 = vmatprep.subr.mxu0 0.0
    %316 = vmatpush1.msra.mxu0 0.0
    %317 = vmatprep.subr.mxu0 0.0
    %318 = vmatpush1.msra.mxu0 0.0
    %319 = vmatprep.subr.mxu0 0.0
    %320 = vmatpush1.msra.mxu0 0.0
    %321 = vmatprep.subr.mxu0 0.0
    %v322 = vand.u32 %v57, 4294901760
    %323 = vmatpush1.msra.mxu0 %v322
    %324 = vmatprep.subr.mxu0 0.0
    %v325 = vand.u32 %v41, 4294901760
    %326 = vmatpush1.msra.mxu0 %v325
    %327 = vmatprep.subr.mxu0 0.0
    %328 = vmatpush2.msra.mxu0 0.0
    %329 = vmatprep.subr.mxu0 0.0
    %330 = vmatpush2.msra.mxu0 0.0
    %331 = vmatprep.subr.mxu0 0.0
    %332 = vmatpush2.msra.mxu0 0.0
    %333 = vmatprep.subr.mxu0 0.0
    %334 = vmatpush2.msra.mxu0 0.0
    %335 = vmatprep.subr.mxu0 0.0
    %336 = vmatpush2.msra.mxu0 0.0
    %337 = vmatprep.subr.mxu0 0.0
    %338 = vmatpush2.msra.mxu0 0.0
    %339 = vmatprep.subr.mxu0 0.0
    %340 = vmatpush2.msra.mxu0 0.0
    %341 = vmatprep.subr.mxu0 0.0
    %342 = vmatpush2.msra.mxu0 0.0
    %343 = vmatprep.subr.mxu0 0.0
    %344 = vmatpush2.msra.mxu0 0.0
    %345 = vmatprep.subr.mxu0 0.0
    %346 = vmatpush2.msra.mxu0 0.0
    %347 = vmatprep.subr.mxu0 0.0
    %348 = vmatpush2.msra.mxu0 0.0
    %349 = vmatprep.subr.mxu0 0.0
    %350 = vmatpush2.msra.mxu0 0.0
    %351 = vmatprep.subr.mxu0 0.0
    %352 = vmatpush2.msra.mxu0 0.0
    %353 = vmatprep.subr.mxu0 0.0
    %354 = vmatpush2.msra.mxu0 0.0
    %355 = vmatprep.subr.mxu0 0.0
    %356 = vmatpush2.msra.mxu0 0.0
    %357 = vmatprep.subr.mxu0 0.0
    %358 = vmatpush2.msra.mxu0 0.0
    %359 = vmatprep.mubr.f32.mxu0 0.0
    %v360 = vand.u32 %v53, 4294901760
    %v361 = vsub.f32 %v53, %v360
    %v362 = vand.u32 %v361, 4294901760
    %363 = vmatmul.mubr.f32.gmra.mxu0 %v362
    %v364 = vpop.f32.mrf.mxu0
    %v365 = vadd.f32 %v290, %v364
    %v366 = vpop.f32.mrf.mxu0
    %367 = vdwg.mxu0
    %368 = vmatprep.subr.mxu0 0.0
    %369 = vmatpush1.msra.mxu0 0.0
    %370 = vmatprep.subr.mxu0 0.0
    %371 = vmatpush1.msra.mxu0 0.0
    %372 = vmatprep.subr.mxu0 0.0
    %373 = vmatpush1.msra.mxu0 0.0
    %374 = vmatprep.subr.mxu0 0.0
    %375 = vmatpush1.msra.mxu0 0.0
    %376 = vmatprep.subr.mxu0 0.0
    %377 = vmatpush1.msra.mxu0 0.0
    %378 = vmatprep.subr.mxu0 0.0
    %379 = vmatpush1.msra.mxu0 0.0
    %380 = vmatprep.subr.mxu0 0.0
    %381 = vmatpush1.msra.mxu0 0.0
    %382 = vmatprep.subr.mxu0 0.0
    %383 = vmatpush1.msra.mxu0 0.0
    %384 = vmatprep.subr.mxu0 0.0
    %385 = vmatpush1.msra.mxu0 0.0
    %386 = vmatprep.subr.mxu0 0.0
    %387 = vmatpush1.msra.mxu0 0.0
    %388 = vmatprep.subr.mxu0 0.0
    %389 = vmatpush1.msra.mxu0 0.0
    %390 = vmatprep.subr.mxu0 0.0
    %391 = vmatpush1.msra.mxu0 0.0
    %392 = vmatprep.subr.mxu0 0.0
    %393 = vmatpush1.msra.mxu0 0.0
    %394 = vmatprep.subr.mxu0 0.0
    %395 = vmatpush1.msra.mxu0 0.0
    %396 = vmatprep.subr.mxu0 0.0
    %v397 = vand.u32 %v57, 4294901760
    %v398 = vsub.f32 %v57, %v397
    %v399 = vand.u32 %v398, 4294901760
    %400 = vmatpush1.msra.mxu0 %v399
    %401 = vmatprep.subr.mxu0 0.0
    %v402 = vand.u32 %v41, 4294901760
    %v403 = vsub.f32 %v41, %v402
    %v404 = vand.u32 %v403, 4294901760
    %405 = vmatpush1.msra.mxu0 %v404
    %406 = vmatprep.subr.mxu0 0.0
    %407 = vmatpush2.msra.mxu0 0.0
    %408 = vmatprep.subr.mxu0 0.0
    %409 = vmatpush2.msra.mxu0 0.0
    %410 = vmatprep.subr.mxu0 0.0
    %411 = vmatpush2.msra.mxu0 0.0
    %412 = vmatprep.subr.mxu0 0.0
    %413 = vmatpush2.msra.mxu0 0.0
    %414 = vmatprep.subr.mxu0 0.0
    %415 = vmatpush2.msra.mxu0 0.0
    %416 = vmatprep.subr.mxu0 0.0
    %417 = vmatpush2.msra.mxu0 0.0
    %418 = vmatprep.subr.mxu0 0.0
    %419 = vmatpush2.msra.mxu0 0.0
    %420 = vmatprep.subr.mxu0 0.0
    %421 = vmatpush2.msra.mxu0 0.0
    %422 = vmatprep.subr.mxu0 0.0
    %423 = vmatpush2.msra.mxu0 0.0
    %424 = vmatprep.subr.mxu0 0.0
    %425 = vmatpush2.msra.mxu0 0.0
    %426 = vmatprep.subr.mxu0 0.0
    %427 = vmatpush2.msra.mxu0 0.0
    %428 = vmatprep.subr.mxu0 0.0
    %429 = vmatpush2.msra.mxu0 0.0
    %430 = vmatprep.subr.mxu0 0.0
    %431 = vmatpush2.msra.mxu0 0.0
    %432 = vmatprep.subr.mxu0 0.0
    %433 = vmatpush2.msra.mxu0 0.0
    %434 = vmatprep.subr.mxu0 0.0
    %435 = vmatpush2.msra.mxu0 0.0
    %436 = vmatprep.subr.mxu0 0.0
    %437 = vmatpush2.msra.mxu0 0.0
    %438 = vmatprep.mubr.f32.mxu0 0.0
    %v439 = vand.u32 %v53, 4294901760
    %440 = vmatmul.mubr.f32.gmra.mxu0 %v439
    %v441 = vpop.f32.mrf.mxu0
    %v442 = vadd.f32 %v365, %v441
    %v443 = vpop.f32.mrf.mxu0
    %444 = vdwg.mxu0
    %445 = vmatprep.subr.mxu0 0.0
    %446 = vmatpush1.msra.mxu0 0.0
    %447 = vmatprep.subr.mxu0 0.0
    %448 = vmatpush1.msra.mxu0 0.0
    %449 = vmatprep.subr.mxu0 0.0
    %450 = vmatpush1.msra.mxu0 0.0
    %451 = vmatprep.subr.mxu0 0.0
    %452 = vmatpush1.msra.mxu0 0.0
    %453 = vmatprep.subr.mxu0 0.0
    %454 = vmatpush1.msra.mxu0 0.0
    %455 = vmatprep.subr.mxu0 0.0
    %456 = vmatpush1.msra.mxu0 0.0
    %457 = vmatprep.subr.mxu0 0.0
    %458 = vmatpush1.msra.mxu0 0.0
    %459 = vmatprep.subr.mxu0 0.0
    %460 = vmatpush1.msra.mxu0 0.0
    %461 = vmatprep.subr.mxu0 0.0
    %462 = vmatpush1.msra.mxu0 0.0
    %463 = vmatprep.subr.mxu0 0.0
    %464 = vmatpush1.msra.mxu0 0.0
    %465 = vmatprep.subr.mxu0 0.0
    %466 = vmatpush1.msra.mxu0 0.0
    %467 = vmatprep.subr.mxu0 0.0
    %468 = vmatpush1.msra.mxu0 0.0
    %469 = vmatprep.subr.mxu0 0.0
    %470 = vmatpush1.msra.mxu0 0.0
    %471 = vmatprep.subr.mxu0 0.0
    %472 = vmatpush1.msra.mxu0 0.0
    %473 = vmatprep.subr.mxu0 0.0
    %v474 = vand.u32 %v57, 4294901760
    %475 = vmatpush1.msra.mxu0 %v474
    %476 = vmatprep.subr.mxu0 0.0
    %v477 = vand.u32 %v41, 4294901760
    %478 = vmatpush1.msra.mxu0 %v477
    %479 = vmatprep.subr.mxu0 0.0
    %480 = vmatpush2.msra.mxu0 0.0
    %481 = vmatprep.subr.mxu0 0.0
    %482 = vmatpush2.msra.mxu0 0.0
    %483 = vmatprep.subr.mxu0 0.0
    %484 = vmatpush2.msra.mxu0 0.0
    %485 = vmatprep.subr.mxu0 0.0
    %486 = vmatpush2.msra.mxu0 0.0
    %487 = vmatprep.subr.mxu0 0.0
    %488 = vmatpush2.msra.mxu0 0.0
    %489 = vmatprep.subr.mxu0 0.0
    %490 = vmatpush2.msra.mxu0 0.0
    %491 = vmatprep.subr.mxu0 0.0
    %492 = vmatpush2.msra.mxu0 0.0
    %493 = vmatprep.subr.mxu0 0.0
    %494 = vmatpush2.msra.mxu0 0.0
    %495 = vmatprep.subr.mxu0 0.0
    %496 = vmatpush2.msra.mxu0 0.0
    %497 = vmatprep.subr.mxu0 0.0
    %498 = vmatpush2.msra.mxu0 0.0
    %499 = vmatprep.subr.mxu0 0.0
    %500 = vmatpush2.msra.mxu0 0.0
    %501 = vmatprep.subr.mxu0 0.0
    %502 = vmatpush2.msra.mxu0 0.0
    %503 = vmatprep.subr.mxu0 0.0
    %504 = vmatpush2.msra.mxu0 0.0
    %505 = vmatprep.subr.mxu0 0.0
    %506 = vmatpush2.msra.mxu0 0.0
    %507 = vmatprep.subr.mxu0 0.0
    %508 = vmatpush2.msra.mxu0 0.0
    %509 = vmatprep.subr.mxu0 0.0
    %510 = vmatpush2.msra.mxu0 0.0
    %511 = vmatprep.mubr.f32.mxu0 0.0
    %v512 = vand.u32 %v53, 4294901760
    %513 = vmatmul.mubr.f32.gmra.mxu0 %v512
    %v514 = vpop.f32.mrf.mxu0
    %v515 = vadd.f32 %v442, %v514
    %v516 = vpop.f32.mrf.mxu0
    %517 = vdwg.mxu0
    %v518 = vadd.f32 %v515, 0.5
    %v519 = vfloor.f32 %v518
    %v520 = vsub.f32 %v515, %v519
    %v521 = vcvt.f32.s32.to.zero.pseudo %v519
    %v522 = vand.u32 %v521, 1
    %vm523 = vcmp.eq.s32.totalorder %v522, 0
    %v524 = vsub.f32 0.0, %v520
    %v525 = vsel %vm523, %v520, %v524
    %v526 = vmul.f32 %v525, %v525
    %v527 = vmul.f32 %v526, 0.07775155
    %v528 = vadd.f32 %v527, -0.5983409
    %v529 = vmul.f32 %v528, %v526
    %v530 = vadd.f32 %v529, 2.550086
    %v531 = vmul.f32 %v530, %v526
    %v532 = vadd.f32 %v531, -5.167711
    %v533 = vmul.f32 %v532, %v526
    %v534 = vadd.f32 %v533, 3.1415927
    %v535 = vmul.f32 %v525, %v534
    %536 = vst [vmem:[#allocation7] sm:$0xff] %v535
    // Predicated region
    $region22: #{tpu_custom_call.1} parent=1 // pred_check
      _
    $region23: #{tpu_custom_call.1} parent=1 // pred_check_branch
      %538 = sbr.rel (0) target = $region25
    $region24: #{tpu_custom_call.1} parent=1 // pred_region
      %s540 = ssub.s32 128, 128
      %541 = vsyncadd [#allocation4], %s540
      %s543 = sshll.u32 [#allocation7], 4
      %s544 = int_to_ptr.vmem [resolvable:$true] %s543
      %546 = dma.vmem_to_hbm [thread:$0]  %s544, 128, %s3, [#allocation4]
    $region25: #{tpu_custom_call.1} parent=1 // pred_fallthru
      _
    // Predicated region
    $region26: #{tpu_custom_call.1} parent=1 // pred_check
      _
    $region27: #{tpu_custom_call.1} parent=1 // pred_check_branch
      %548 = sbr.rel (0) target = $region29
    $region28: #{tpu_custom_call.1} parent=1 // pred_region
      %549 = dma.done [#allocation4], 128
    $region29: #{tpu_custom_call.1} parent=1 // pred_fallthru
      _
    %550 = vsyncpa [#allocation3], 1
    %551 = vsyncpa [#allocation6], 1
    %552 = vsyncpa [#allocation4], 1

</llo_original>
